<compile_context>
chip_gen: v5e
topology: v5e:2x2
jax: 0.10.0
libtpu: 0.0.40
codegen_flags: <defaults>
</compile_context>

<pallas_src>
import numpy as np
import jax
import jax.numpy as jnp
from jax.experimental import pallas as pl
from jax.experimental.pallas import tpu as pltpu


def _round_up(x, m):
    return ((x + m - 1) // m) * m


# ----------------------------------------------------------------------------
# Generation-aware VMEM budget and tile selection.
# ----------------------------------------------------------------------------
def _vmem_budget():
    phys = 128 * 1024 * 1024
    try:
        info = pltpu.get_tpu_info()
        phys = int(getattr(info, "vmem_capacity_bytes", phys))
    except Exception:
        pass
    # Leave headroom under the physical capacity (v7x has only 64 MiB per TensorCore).
    return min(phys * 3 // 4, 96 * 1024 * 1024), phys


def _default_tiles(phys):
    if phys >= 100 * 1024 * 1024:   # v5e / v6e (128 MiB VMEM): biggest tile that fits
        return 1024, 1024           # (tile_m, tile_n)
    return 512, 256                 # v7x (64 MiB VMEM): smaller tiles, more headroom


def _shrink_tile_m(tm, c_max, act_bytes, budget):
    while tm > 256:
        est = (2 * tm * c_max * act_bytes     # double-buffered activation inputs
               + 2 * tm * c_max * act_bytes   # double-buffered y output
               + 4 * tm * c_max * 4)          # z / y f32 temporaries + slack
        if est <= budget // 2:
            break
        tm //= 2
    return tm


def _shrink_tile_n(tn, S, D2, act_bytes, budget):
    while tn > 256:
        est = (2 * tn * 3 * 4 + 2 * tn * D2 * act_bytes   # xyz1 tile + out tile (dbl-buffered)
               + 5 * tn * S * 4                            # d, dd, W, col, masks temporaries
               + S * (4 + D2) * 4)                         # resident xyz2 / |xyz2|^2 / points2
        if est <= budget // 2:
            break
        tn //= 2
    return tn


# ----------------------------------------------------------------------------
# 3-NN inverse-distance interpolation, tiled over N (grid = (B, N/TN)).
# ----------------------------------------------------------------------------
def _interp_kernel(xyz1_ref, xyz2_ref, sq2_ref, pts2_ref, out_ref):
    x1 = xyz1_ref[0]          # [TN, 3]  query points (tile of N)
    x2 = xyz2_ref[0]          # [S, 3]   sampled points   (resident across N tiles)
    sq2 = sq2_ref[0, 0]       # [S]      |x2|^2, precomputed in glue (hoisted, N-invariant)
    p2 = pts2_ref[0]          # [S, D2]  sampled features (resident across N tiles)
    TN = x1.shape[0]
    S = x2.shape[0]

    # squared distance (torch square_distance formula): -2*x1.x2 + |x1|^2 + |x2|^2
    d = -2.0 * jax.lax.dot_general(
        x1, x2, (((1,), (1,)), ((), ())), preferred_element_type=jnp.float32)   # [TN, S]
    d = d + jnp.sum(x1 * x1, axis=1, keepdims=True)                              # + [TN, 1]
    d = d + sq2[None, :]                                                          # + [1, S]
    d = jnp.maximum(d, 0.0)   # guard: formula can go slightly negative for coincident points

    col = jax.lax.broadcasted_iota(jnp.int32, (TN, S), 1)
    W = jnp.zeros((TN, S), jnp.float32)
    wsum = jnp.zeros((TN, 1), jnp.float32)
    dd = d
    BIG = jnp.float32(1e30)
    # 3 nearest neighbours via iterative first-argmin (matches stable-sort tie-break);
    # builds a sparse inverse-distance weight matrix with 3 non-zeros per row.
    # TODO(synk): optional packed-key (dist|index) single-reduction argmin would halve the
    # XLU reduces but can flip neighbor choice on near-ties; keep exact version.
    for _ in range(3):
        minval = jnp.min(dd, axis=1, keepdims=True)                              # [TN, 1]
        amin = jnp.min(jnp.where(dd == minval, col, S), axis=1, keepdims=True)   # first argmin
        onehot = col == amin
        recip = 1.0 / (minval + 1e-8)
        W = W + jnp.where(onehot, recip, 0.0)
        wsum = wsum + recip               # normalizer accumulated here: no extra [TN,S] reduce
        dd = jnp.where(onehot, BIG, dd)

    Wn = W / wsum
    # weighted gather == (sparse weights) @ points2 on the MXU; cast only at the store
    out_ref[0] = jnp.dot(Wn, p2, preferred_element_type=jnp.float32).astype(out_ref.dtype)


def interpolate(xyz1_nc, xyz2_sc, pts2_sd, out_dtype, *, tile_n, vmem_limit):
    """xyz1 [B,N,3], xyz2 [B,S,3], points2 [B,S,D2] (f32) -> [B,N,D2] in out_dtype."""
    B, N, _ = xyz1_nc.shape
    S = xyz2_sc.shape[1]
    D2 = pts2_sd.shape[2]

    TN = min(tile_n, _round_up(N, 8))
    N_pad = _round_up(N, TN)
    if N_pad != N:
        xyz1_nc = jnp.pad(xyz1_nc, ((0, 0), (0, N_pad - N), (0, 0)))
    sq2 = jnp.sum(xyz2_sc * xyz2_sc, axis=-1)[:, None, :]        # [B, 1, S]  tiny

    out = pl.pallas_call(
        _interp_kernel,
        out_shape=jax.ShapeDtypeStruct((B, N_pad, D2), out_dtype),
        grid=(B, N_pad // TN),
        in_specs=[
            pl.BlockSpec((1, TN, 3), lambda b, n: (b, n, 0)),
            pl.BlockSpec((1, S, 3), lambda b, n: (b, 0, 0)),    # N-invariant -> resident
            pl.BlockSpec((1, 1, S), lambda b, n: (b, 0, 0)),    # N-invariant -> resident
            pl.BlockSpec((1, S, D2), lambda b, n: (b, 0, 0)),   # N-invariant -> resident
        ],
        out_specs=pl.BlockSpec((1, TN, D2), lambda b, n: (b, n, 0)),
        compiler_params=pltpu.CompilerParams(
            dimension_semantics=("parallel", "parallel"),
            vmem_limit_bytes=vmem_limit),
    )(xyz1_nc, xyz2_sc, sq2, pts2_sd)
    if N_pad != N:
        out = out[:, :N, :]
    return out


# ----------------------------------------------------------------------------
# MLP layer kernels (Conv1d(k=1) + training-mode BatchNorm1d + ReLU).
# ----------------------------------------------------------------------------
def _make_stats_kernel(n_in, tile_m):
    """z = sum_i x_i @ w_i ; accumulate per-channel sum(z), sum(z*z) into (1,8,C) blocks."""
    def kernel(*refs):
        x_refs = refs[:n_in]
        w_refs = refs[n_in:2 * n_in]
        sum_ref, sq_ref = refs[2 * n_in], refs[2 * n_in + 1]

        @pl.when(pl.program_id(1) == 0)
        def _():
            sum_ref[...] = jnp.zeros_like(sum_ref)
            sq_ref[...] = jnp.zeros_like(sq_ref)

        z = jnp.dot(x_refs[0][...], w_refs[0][...], preferred_element_type=jnp.float32)
        for xr, wr in zip(x_refs[1:], w_refs[1:]):
            z = z + jnp.dot(xr[...], wr[...], preferred_element_type=jnp.float32)
        c_out = z.shape[1]
        # (TM//8, 8, C) view: axis-0 sum is vreg-wise VPU adds (no per-tile XLU sublane reduce)
        z3 = z.reshape(tile_m // 8, 8, c_out)
        sum_ref[...] += jnp.sum(z3, axis=0)[None]
        sq_ref[...] += jnp.sum(z3 * z3, axis=0)[None]
    return kernel


def _make_fused_kernel(n_in, tile_m, n_valid, t_per_p):
    """apply(layer i) fused with stats(layer i+1): recompute z_i, y_i = relu(z_i*scale+shift),
    store y_i, then accumulate next-layer sum/sumsq from the in-VMEM y tile (no 2nd HBM read)."""
    def kernel(*refs):
        x_refs = refs[:n_in]
        w_refs = refs[n_in:2 * n_in]
        scale_ref, shift_ref, wnext_ref = refs[2 * n_in:2 * n_in + 3]
        y_ref, nsum_ref, nsq_ref = refs[2 * n_in + 3:]

        p = pl.program_id(0)
        t = pl.program_id(1)

        @pl.when(t == 0)
        def _():
            nsum_ref[...] = jnp.zeros_like(nsum_ref)
            nsq_ref[...] = jnp.zeros_like(nsq_ref)

        z = jnp.dot(x_refs[0][...], w_refs[0][...], preferred_element_type=jnp.float32)
        for xr, wr in zip(x_refs[1:], w_refs[1:]):
            z = z + jnp.dot(xr[...], wr[...], preferred_element_type=jnp.float32)
        # BN + ReLU in f32; padded rows zeroed so they never pollute next-layer stats.
        y = jnp.maximum(z * scale_ref[...] + shift_ref[...], 0.0)
        row = (jax.lax.broadcasted_iota(jnp.int32, (tile_m, 1), 0)
               + (p * t_per_p + t) * tile_m)
        y = jnp.where(row < n_valid, y, 0.0)
        y_out = y.astype(y_ref.dtype)          # cast only at the store (f32 VPU math, v5e-safe)
        y_ref[...] = y_out

        zn = jnp.dot(y_out, wnext_ref[...], preferred_element_type=jnp.float32)
        c_next = zn.shape[1]
        zn3 = zn.reshape(tile_m // 8, 8, c_next)
        nsum_ref[...] += jnp.sum(zn3, axis=0)[None]
        nsq_ref[...] += jnp.sum(zn3 * zn3, axis=0)[None]
    return kernel


def _make_apply_kernel(n_in, tile_m, n_valid):
    """Final layer: out = relu(z * scale + shift); padded rows zeroed."""
    def kernel(*refs):
        x_refs = refs[:n_in]
        w_refs = refs[n_in:2 * n_in]
        scale_ref, shift_ref, y_ref = refs[2 * n_in:]

        z = jnp.dot(x_refs[0][...], w_refs[0][...], preferred_element_type=jnp.float32)
        for xr, wr in zip(x_refs[1:], w_refs[1:]):
            z = z + jnp.dot(xr[...], wr[...], preferred_element_type=jnp.float32)
        y = jnp.maximum(z * scale_ref[...] + shift_ref[...], 0.0)
        row = jax.lax.broadcasted_iota(jnp.int32, (tile_m, 1), 0) + pl.program_id(0) * tile_m
        y_ref[...] = jnp.where(row < n_valid, y, 0.0).astype(y_ref.dtype)
    return kernel


def _stats_call(xs, ws, tile_m, P, T, vmem_limit):
    n_in = len(xs)
    c_out = ws[0].shape[1]
    x_specs = [pl.BlockSpec((tile_m, x.shape[1]), lambda p, t, T=T: (p * T + t, 0)) for x in xs]
    w_specs = [pl.BlockSpec(w.shape, lambda p, t: (0, 0)) for w in ws]     # weights resident
    acc_spec = pl.BlockSpec((1, 8, c_out), lambda p, t: (p, 0, 0))         # per-p accumulator
    return pl.pallas_call(
        _make_stats_kernel(n_in, tile_m),
        out_shape=(jax.ShapeDtypeStruct((P, 8, c_out), jnp.float32),
                   jax.ShapeDtypeStruct((P, 8, c_out), jnp.float32)),
        grid=(P, T),
        in_specs=x_specs + w_specs,
        out_specs=(acc_spec, acc_spec),
        compiler_params=pltpu.CompilerParams(
            dimension_semantics=("parallel", "arbitrary"),   # P shards across v7x TCs
            vmem_limit_bytes=vmem_limit),
    )(*xs, *ws)


def _fused_call(xs, ws, scale, shift, w_next, tile_m, P, T, n_valid, BN_pad,
                act_dtype, vmem_limit):
    n_in = len(xs)
    c_out = ws[0].shape[1]
    c_next = w_next.shape[1]
    x_specs = [pl.BlockSpec((tile_m, x.shape[1]), lambda p, t, T=T: (p * T + t, 0)) for x in xs]
    w_specs = [pl.BlockSpec(w.shape, lambda p, t: (0, 0)) for w in ws]
    vec_spec = pl.BlockSpec((1, c_out), lambda p, t: (0, 0))
    wnext_spec = pl.BlockSpec(w_next.shape, lambda p, t: (0, 0))
    y_spec = pl.BlockSpec((tile_m, c_out), lambda p, t, T=T: (p * T + t, 0))
    acc_spec = pl.BlockSpec((1, 8, c_next), lambda p, t: (p, 0, 0))
    return pl.pallas_call(
        _make_fused_kernel(n_in, tile_m, n_valid, T),
        out_shape=(jax.ShapeDtypeStruct((BN_pad, c_out), act_dtype),
                   jax.ShapeDtypeStruct((P, 8, c_next), jnp.float32),
                   jax.ShapeDtypeStruct((P, 8, c_next), jnp.float32)),
        grid=(P, T),
        in_specs=x_specs + w_specs + [vec_spec, vec_spec, wnext_spec],
        out_specs=(y_spec, acc_spec, acc_spec),
        compiler_params=pltpu.CompilerParams(
            dimension_semantics=("parallel", "arbitrary"),
            vmem_limit_bytes=vmem_limit),
    )(*xs, *ws, scale, shift, w_next)


def _apply_call(xs, ws, scale, shift, tile_m, n_valid, BN_pad, out_dtype, vmem_limit):
    n_in = len(xs)
    c_out = ws[0].shape[1]
    x_specs = [pl.BlockSpec((tile_m, x.shape[1]), lambda i: (i, 0)) for x in xs]
    w_specs = [pl.BlockSpec(w.shape, lambda i: (0, 0)) for w in ws]
    vec_spec = pl.BlockSpec((1, c_out), lambda i: (0, 0))
    return pl.pallas_call(
        _make_apply_kernel(n_in, tile_m, n_valid),
        out_shape=jax.ShapeDtypeStruct((BN_pad, c_out), out_dtype),
        grid=(BN_pad // tile_m,),
        in_specs=x_specs + w_specs + [vec_spec, vec_spec],
        out_specs=pl.BlockSpec((tile_m, c_out), lambda i: (i, 0)),
        compiler_params=pltpu.CompilerParams(
            dimension_semantics=("parallel",),
            vmem_limit_bytes=vmem_limit),
    )(*xs, *ws, scale, shift)


def _bn_fold(zsum_p, zsq_p, gamma, beta, n_valid):
    """Fold training-mode BN into scale/shift. Conv bias cancels with the batch mean.
    Note: E[z^2]-E[z]^2 in f32 is mildly cancellation-prone; clamped at 0 (acceptable for
    typical activation ranges — a per-tile (count,mean,M2) merge is the robust alternative)."""
    zsum = jnp.sum(zsum_p, axis=(0, 1))               # [C]
    zsq = jnp.sum(zsq_p, axis=(0, 1))                 # [C]
    inv_n = jnp.float32(1.0 / n_valid)
    mean = zsum * inv_n
    var = jnp.maximum(zsq * inv_n - mean * mean, 0.0)  # biased variance (matches BN train mode)
    scale = gamma.astype(jnp.float32) * jax.lax.rsqrt(var + 1e-5)
    shift = beta.astype(jnp.float32) - mean * scale
    return scale[None, :], shift[None, :]


# ----------------------------------------------------------------------------
# Public wrapper (PyTorch NCW layout in/out).
# ----------------------------------------------------------------------------
def pointnet_fp_forward(xyz1, xyz2, points1, points2, params, *,
                        act_dtype=jnp.bfloat16, tile_n=None, tile_m=None):
    """xyz1 [B,C,N], xyz2 [B,C,S], points1 [B,D1,N] or None, points2 [B,D2,S] -> [B,D',N]."""
    vmem_limit, phys = _vmem_budget()
    def_tm, def_tn = _default_tiles(phys)
    act_bytes = jnp.dtype(act_dtype).itemsize

    x1 = jnp.transpose(xyz1, (0, 2, 1)).astype(jnp.float32)      # [B, N, 3]
    x2 = jnp.transpose(xyz2, (0, 2, 1)).astype(jnp.float32)      # [B, S, 3]
    p2 = jnp.transpose(points2, (0, 2, 1)).astype(jnp.float32)   # [B, S, D2]  (S is small)
    # TODO(synk): NCW<->NWC transposes of the large activations (points1, final output)
    # remain XLA glue; contracting native [B, D, N] layouts inside layer 0 would remove them.
    B, N, _ = x1.shape
    S = x2.shape[1]
    D2 = p2.shape[2]

    if S == 1:
        interp = jnp.broadcast_to(p2, (B, N, D2)).astype(act_dtype)   # pure broadcast in glue
    else:
        assert S >= 3, "3-NN interpolation kernel requires S >= 3"  # TODO(synk): S==2 path
        tn = tile_n if tile_n is not None else _shrink_tile_n(def_tn, S, D2, act_bytes, vmem_limit)
        interp = interpolate(x1, x2, p2, act_dtype, tile_n=tn, vmem_limit=vmem_limit)

    # --- flatten rows, choose tiles / megacore split ---------------------------------
    BN = B * N
    chan = [p[0].shape[0] for p in params]                       # C_out per layer
    c_in0 = (points1.shape[1] if points1 is not None else 0) + D2
    c_max = max([c_in0] + chan)
    tm = tile_m if tile_m is not None else _shrink_tile_m(def_tm, c_max, act_bytes, vmem_limit)
    TM = min(tm, _round_up(BN, 8))
    P = 2 if (BN + TM - 1) // TM >= 2 else 1                     # v7x megacore split for stats
    BN_pad = _round_up(BN, P * TM)
    T = BN_pad // (P * TM)

    def _flat_pad(a):                      # [B, N, C] -> [BN_pad, C] (zero-padded rows)
        a = a.reshape(BN, a.shape[-1])
        if BN_pad != BN:
            a = jnp.pad(a, ((0, BN_pad - BN), (0, 0)))
        return a

    if points1 is not None:
        p1 = _flat_pad(jnp.transpose(points1, (0, 2, 1)).astype(act_dtype))
        xs = [p1, _flat_pad(interp)]       # concat fused into layer-0 matmul (W row-split)
        split = p1.shape[1]
    else:
        xs = [_flat_pad(interp)]
        split = 0

    wts = [jnp.transpose(w).astype(act_dtype) for (w, _, _, _) in params]   # [C_in, C_out]
    gammas = [g for (_, _, g, _) in params]
    betas = [bt for (_, _, _, bt) in params]
    L = len(params)
    # TODO(synk): for lane-dense stores, pad C_out/D2 to multiples of 128 when real channel
    # counts are not already multiples of 128 (toy sizes here generate masked vst.msk).

    ws_cur = [wts[0][:split], wts[0][split:]] if split else [wts[0]]
    x_cur = xs

    # layer-0 statistics (the only pass that reads the layer-0 inputs twice overall)
    zsum_p, zsq_p = _stats_call(x_cur, ws_cur, TM, P, T, vmem_limit)

    y = None
    for i in range(L):
        scale, shift = _bn_fold(zsum_p, zsq_p, gammas[i], betas[i], BN)
        if i < L - 1:
            y, zsum_p, zsq_p = _fused_call(x_cur, ws_cur, scale, shift, wts[i + 1],
                                           TM, P, T, BN, BN_pad, act_dtype, vmem_limit)
            x_cur = [y]
            ws_cur = [wts[i + 1]]
        else:
            y = _apply_call(x_cur, ws_cur, scale, shift, TM, BN, BN_pad,
                            jnp.float32, vmem_limit)

    out = y[:BN].reshape(B, N, -1)
    return jnp.transpose(out, (0, 2, 1))


# ----------------------------------------------------------------------------
# Pure-JAX reference reproducing the PyTorch forward.
# ----------------------------------------------------------------------------
def reference_forward(xyz1, xyz2, points1, points2, params):
    x1 = jnp.transpose(xyz1, (0, 2, 1))
    x2 = jnp.transpose(xyz2, (0, 2, 1))
    p2 = jnp.transpose(points2, (0, 2, 1))
    B, N, _ = x1.shape
    dist = (-2.0 * jnp.einsum('bnc,bsc->bns', x1, x2)
            + jnp.sum(x1 ** 2, -1)[:, :, None]
            + jnp.sum(x2 ** 2, -1)[:, None, :])
    idx = jnp.argsort(dist, axis=-1)[:, :, :3]
    d3 = jnp.take_along_axis(dist, idx, axis=-1)
    recip = 1.0 / (d3 + 1e-8)
    wgt = recip / jnp.sum(recip, -1, keepdims=True)
    gathered = jax.vmap(lambda pts, ix: pts[ix])(p2, idx)     # [B, N, 3, D2]
    interp = jnp.sum(gathered * wgt[..., None], axis=2)
    p1 = jnp.transpose(points1, (0, 2, 1))
    x = jnp.concatenate([p1, interp], axis=-1).reshape(B * N, -1)
    for (w, b, gamma, beta) in params:
        y = x @ w.T + b
        mean = jnp.mean(y, axis=0, keepdims=True)
        var = jnp.mean((y - mean) ** 2, axis=0, keepdims=True)
        x = jnp.maximum((y - mean) / jnp.sqrt(var + 1e-5) * gamma + beta, 0.0)
    return jnp.transpose(x.reshape(B, N, -1), (0, 2, 1))


if __name__ == "__main__":
    key = jax.random.PRNGKey(0)
    B, N, S = 2, 16, 8
    D1, D2 = 4, 6
    in_channel = D1 + D2
    mlp = [32, 16]

    k = jax.random.split(key, 5)
    xyz1 = jax.random.normal(k[0], (B, 3, N), jnp.float32)
    xyz2 = jax.random.normal(k[1], (B, 3, S), jnp.float32)
    points1 = jax.random.normal(k[2], (B, D1, N), jnp.float32)
    points2 = jax.random.normal(k[3], (B, D2, S), jnp.float32)

    # Deterministic params: Conv1d weight [C_out, C_in] (+bias), BatchNorm1d gamma/beta.
    params = []
    last = in_channel
    pk = k[4]
    for out_c in mlp:
        pk, ka, kb, kc, kd = jax.random.split(pk, 5)
        w = 0.1 * jax.random.normal(ka, (out_c, last), jnp.float32)
        bias = 0.1 * jax.random.normal(kb, (out_c,), jnp.float32)
        gamma = 1.0 + 0.1 * jax.random.normal(kc, (out_c,), jnp.float32)
        beta = 0.1 * jax.random.normal(kd, (out_c,), jnp.float32)
        params.append((w, bias, gamma, beta))
        last = out_c

    ref = np.asarray(reference_forward(xyz1, xyz2, points1, points2, params))

    # Exact-semantics check with f32 activations (tight tolerance).
    out_f32 = pointnet_fp_forward(xyz1, xyz2, points1, points2, params,
                                  act_dtype=jnp.float32)
    out_f32 = jax.block_until_ready(out_f32)
    np.testing.assert_allclose(np.asarray(out_f32), ref, rtol=1e-3, atol=1e-3)

    # Performance path with bf16 activations/weights (looser tolerance for bf16 rounding).
    out_bf16 = pointnet_fp_forward(xyz1, xyz2, points1, points2, params,
                                   act_dtype=jnp.bfloat16)
    out_bf16 = jax.block_until_ready(out_bf16)
    np.testing.assert_allclose(np.asarray(out_bf16, dtype=np.float32), ref,
                               rtol=5e-2, atol=5e-2)

    print("KERNEL_OK")
</pallas_src>

<mosaic_0001>
module attributes {stable_mosaic.version = 11 : i64} {
  func.func @_interp_kernel(%arg0: i32, %arg1: i32, %arg2: memref<1x16x3xf32, #tpu.memory_space<vmem>>, %arg3: memref<1x8x3xf32, #tpu.memory_space<vmem>>, %arg4: memref<1x1x8xf32, #tpu.memory_space<vmem>>, %arg5: memref<1x8x6xf32, #tpu.memory_space<vmem>>, %arg6: memref<1x16x6xf32, #tpu.memory_space<vmem>>) attributes {dimension_semantics = [#tpu.dimension_semantics<parallel>, #tpu.dimension_semantics<parallel>], iteration_bounds = array<i64: 2, 1>, scalar_prefetch = 0 : i64, scratch_operands = 0 : i64, tpu.core_type = #tpu.core_type<tc>, window_params = [{transform_indices = @transform_0, window_bounds = array<i64: 1, 16, 3>}, {transform_indices = @transform_1, window_bounds = array<i64: 1, 8, 3>}, {transform_indices = @transform_2, window_bounds = array<i64: 1, 1, 8>}, {transform_indices = @transform_3, window_bounds = array<i64: 1, 8, 6>}, {transform_indices = @transform_4, window_bounds = array<i64: 1, 16, 6>}]} {
    %c0 = arith.constant 0 : index
    %c0_0 = arith.constant 0 : index
    %c0_1 = arith.constant 0 : index
    %0 = vector.load %arg2[%c0, %c0_0, %c0_1] : memref<1x16x3xf32, #tpu.memory_space<vmem>>, vector<1x16x3xf32>
    %1 = vector.shape_cast %0 : vector<1x16x3xf32> to vector<16x3xf32>
    %c0_2 = arith.constant 0 : index
    %c0_3 = arith.constant 0 : index
    %c0_4 = arith.constant 0 : index
    %2 = vector.load %arg3[%c0_2, %c0_3, %c0_4] : memref<1x8x3xf32, #tpu.memory_space<vmem>>, vector<1x8x3xf32>
    %3 = vector.shape_cast %2 : vector<1x8x3xf32> to vector<8x3xf32>
    %c0_5 = arith.constant 0 : index
    %c0_6 = arith.constant 0 : index
    %c0_7 = arith.constant 0 : index
    %4 = vector.load %arg4[%c0_5, %c0_6, %c0_7] : memref<1x1x8xf32, #tpu.memory_space<vmem>>, vector<1x1x8xf32>
    %5 = vector.shape_cast %4 : vector<1x1x8xf32> to vector<8xf32>
    %c0_8 = arith.constant 0 : index
    %c0_9 = arith.constant 0 : index
    %c0_10 = arith.constant 0 : index
    %6 = vector.load %arg5[%c0_8, %c0_9, %c0_10] : memref<1x8x6xf32, #tpu.memory_space<vmem>>, vector<1x8x6xf32>
    %7 = vector.shape_cast %6 : vector<1x8x6xf32> to vector<8x6xf32>
    %cst = arith.constant dense<0.000000e+00> : vector<16x8xf32>
    %8 = tpu.matmul %1, %3, %cst {dimension_numbers = #tpu.dot_dimension_numbers<[1], [1], [0], [0], [0, 0, 1, 0], [], []>} : vector<16x3xf32>, vector<8x3xf32>, vector<16x8xf32> -> vector<16x8xf32>
    %cst_11 = arith.constant -2.000000e+00 : f32
    %9 = vector.broadcast %cst_11 : f32 to vector<16x8xf32>
    %10 = arith.mulf %9, %8 : vector<16x8xf32>
    %11 = arith.mulf %1, %1 : vector<16x3xf32>
    %cst_12 = arith.constant dense<0.000000e+00> : vector<16xf32>
    %12 = vector.multi_reduction <add>, %11, %cst_12 [1] : vector<16x3xf32> to vector<16xf32>
    %13 = vector.shape_cast %12 : vector<16xf32> to vector<16x1xf32>
    %14 = vector.broadcast %13 : vector<16x1xf32> to vector<16x8xf32>
    %15 = arith.addf %10, %14 : vector<16x8xf32>
    %16 = vector.shape_cast %5 : vector<8xf32> to vector<1x8xf32>
    %17 = vector.broadcast %16 : vector<1x8xf32> to vector<16x8xf32>
    %18 = arith.addf %15, %17 : vector<16x8xf32>
    %cst_13 = arith.constant 0.000000e+00 : f32
    %19 = vector.broadcast %cst_13 : f32 to vector<16x8xf32>
    %20 = arith.maximumf %18, %19 : vector<16x8xf32>
    %21 = tpu.iota {dimensions = array<i32: 1>} : vector<16x8xi32>
    %cst_14 = arith.constant 0.000000e+00 : f32
    %22 = vector.broadcast %cst_14 : f32 to vector<16x8xf32>
    %cst_15 = arith.constant 0.000000e+00 : f32
    %23 = vector.broadcast %cst_15 : f32 to vector<16x1xf32>
    %cst_16 = arith.constant dense<0x7F800000> : vector<16xf32>
    %24 = vector.multi_reduction <minimumf>, %20, %cst_16 [1] : vector<16x8xf32> to vector<16xf32>
    %25 = vector.shape_cast %24 : vector<16xf32> to vector<16x1xf32>
    %26 = vector.broadcast %25 : vector<16x1xf32> to vector<16x8xf32>
    %27 = arith.cmpf oeq, %20, %26 : vector<16x8xf32>
    %c8_i32 = arith.constant 8 : i32
    %28 = vector.broadcast %c8_i32 : i32 to vector<16x8xi32>
    %29 = arith.select %27, %21, %28 : vector<16x8xi1>, vector<16x8xi32>
    %cst_17 = arith.constant dense<2147483647> : vector<16xi32>
    %30 = vector.multi_reduction <minsi>, %29, %cst_17 [1] : vector<16x8xi32> to vector<16xi32>
    %31 = vector.shape_cast %30 : vector<16xi32> to vector<16x1xi32>
    %32 = vector.broadcast %31 : vector<16x1xi32> to vector<16x8xi32>
    %33 = arith.cmpi eq, %21, %32 : vector<16x8xi32>
    %cst_18 = arith.constant 9.99999993E-9 : f32
    %34 = vector.broadcast %cst_18 : f32 to vector<16x1xf32>
    %35 = arith.addf %25, %34 : vector<16x1xf32>
    %cst_19 = arith.constant 1.000000e+00 : f32
    %36 = vector.broadcast %cst_19 : f32 to vector<16x1xf32>
    %37 = arith.divf %36, %35 : vector<16x1xf32>
    %cst_20 = arith.constant 0.000000e+00 : f32
    %38 = vector.shape_cast %37 : vector<16x1xf32> to vector<16x1xf32>
    %39 = vector.broadcast %38 : vector<16x1xf32> to vector<16x8xf32>
    %40 = vector.broadcast %cst_20 : f32 to vector<16x8xf32>
    %41 = arith.select %33, %39, %40 : vector<16x8xi1>, vector<16x8xf32>
    %42 = arith.addf %22, %41 : vector<16x8xf32>
    %43 = arith.addf %23, %37 : vector<16x1xf32>
    %cst_21 = arith.constant 1.000000e+30 : f32
    %44 = vector.broadcast %cst_21 : f32 to vector<16x8xf32>
    %45 = arith.select %33, %44, %20 : vector<16x8xi1>, vector<16x8xf32>
    %cst_22 = arith.constant dense<0x7F800000> : vector<16xf32>
    %46 = vector.multi_reduction <minimumf>, %45, %cst_22 [1] : vector<16x8xf32> to vector<16xf32>
    %47 = vector.shape_cast %46 : vector<16xf32> to vector<16x1xf32>
    %48 = vector.broadcast %47 : vector<16x1xf32> to vector<16x8xf32>
    %49 = arith.cmpf oeq, %45, %48 : vector<16x8xf32>
    %c8_i32_23 = arith.constant 8 : i32
    %50 = vector.broadcast %c8_i32_23 : i32 to vector<16x8xi32>
    %51 = arith.select %49, %21, %50 : vector<16x8xi1>, vector<16x8xi32>
    %cst_24 = arith.constant dense<2147483647> : vector<16xi32>
    %52 = vector.multi_reduction <minsi>, %51, %cst_24 [1] : vector<16x8xi32> to vector<16xi32>
    %53 = vector.shape_cast %52 : vector<16xi32> to vector<16x1xi32>
    %54 = vector.broadcast %53 : vector<16x1xi32> to vector<16x8xi32>
    %55 = arith.cmpi eq, %21, %54 : vector<16x8xi32>
    %cst_25 = arith.constant 9.99999993E-9 : f32
    %56 = vector.broadcast %cst_25 : f32 to vector<16x1xf32>
    %57 = arith.addf %47, %56 : vector<16x1xf32>
    %cst_26 = arith.constant 1.000000e+00 : f32
    %58 = vector.broadcast %cst_26 : f32 to vector<16x1xf32>
    %59 = arith.divf %58, %57 : vector<16x1xf32>
    %cst_27 = arith.constant 0.000000e+00 : f32
    %60 = vector.shape_cast %59 : vector<16x1xf32> to vector<16x1xf32>
    %61 = vector.broadcast %60 : vector<16x1xf32> to vector<16x8xf32>
    %62 = vector.broadcast %cst_27 : f32 to vector<16x8xf32>
    %63 = arith.select %55, %61, %62 : vector<16x8xi1>, vector<16x8xf32>
    %64 = arith.addf %42, %63 : vector<16x8xf32>
    %65 = arith.addf %43, %59 : vector<16x1xf32>
    %cst_28 = arith.constant 1.000000e+30 : f32
    %66 = vector.broadcast %cst_28 : f32 to vector<16x8xf32>
    %67 = arith.select %55, %66, %45 : vector<16x8xi1>, vector<16x8xf32>
    %cst_29 = arith.constant dense<0x7F800000> : vector<16xf32>
    %68 = vector.multi_reduction <minimumf>, %67, %cst_29 [1] : vector<16x8xf32> to vector<16xf32>
    %69 = vector.shape_cast %68 : vector<16xf32> to vector<16x1xf32>
    %70 = vector.broadcast %69 : vector<16x1xf32> to vector<16x8xf32>
    %71 = arith.cmpf oeq, %67, %70 : vector<16x8xf32>
    %c8_i32_30 = arith.constant 8 : i32
    %72 = vector.broadcast %c8_i32_30 : i32 to vector<16x8xi32>
    %73 = arith.select %71, %21, %72 : vector<16x8xi1>, vector<16x8xi32>
    %cst_31 = arith.constant dense<2147483647> : vector<16xi32>
    %74 = vector.multi_reduction <minsi>, %73, %cst_31 [1] : vector<16x8xi32> to vector<16xi32>
    %75 = vector.shape_cast %74 : vector<16xi32> to vector<16x1xi32>
    %76 = vector.broadcast %75 : vector<16x1xi32> to vector<16x8xi32>
    %77 = arith.cmpi eq, %21, %76 : vector<16x8xi32>
    %cst_32 = arith.constant 9.99999993E-9 : f32
    %78 = vector.broadcast %cst_32 : f32 to vector<16x1xf32>
    %79 = arith.addf %69, %78 : vector<16x1xf32>
    %cst_33 = arith.constant 1.000000e+00 : f32
    %80 = vector.broadcast %cst_33 : f32 to vector<16x1xf32>
    %81 = arith.divf %80, %79 : vector<16x1xf32>
    %cst_34 = arith.constant 0.000000e+00 : f32
    %82 = vector.shape_cast %81 : vector<16x1xf32> to vector<16x1xf32>
    %83 = vector.broadcast %82 : vector<16x1xf32> to vector<16x8xf32>
    %84 = vector.broadcast %cst_34 : f32 to vector<16x8xf32>
    %85 = arith.select %77, %83, %84 : vector<16x8xi1>, vector<16x8xf32>
    %86 = arith.addf %64, %85 : vector<16x8xf32>
    %87 = arith.addf %65, %81 : vector<16x1xf32>
    %88 = vector.broadcast %87 : vector<16x1xf32> to vector<16x8xf32>
    %89 = arith.divf %86, %88 : vector<16x8xf32>
    %cst_35 = arith.constant dense<0.000000e+00> : vector<16x6xf32>
    %90 = tpu.matmul %89, %7, %cst_35 {dimension_numbers = #tpu.dot_dimension_numbers<[1], [0], [0], [1], [0, 0, 1, 1], [], []>} : vector<16x8xf32>, vector<8x6xf32>, vector<16x6xf32> -> vector<16x6xf32>
    %c0_36 = arith.constant 0 : index
    %c0_37 = arith.constant 0 : index
    %c0_38 = arith.constant 0 : index
    %91 = vector.load %arg6[%c0_36, %c0_37, %c0_38] : memref<1x16x6xf32, #tpu.memory_space<vmem>>, vector<1x16x6xf32>
    %92 = vector.shape_cast %91 : vector<1x16x6xf32> to vector<16x6xf32>
    %93 = vector.shape_cast %90 : vector<16x6xf32> to vector<1x16x6xf32>
    tpu.vector_store %arg6[%c0_36, %c0_37, %c0_38], %93 {strides = array<i32>} : memref<1x16x6xf32, #tpu.memory_space<vmem>>, vector<1x16x6xf32>,
    return
  }
  func.func @transform_0(%arg0: i32, %arg1: i32) -> (i32, i32, i32) {
    %c0_i32 = arith.constant 0 : i32
    %c0_i32_0 = arith.constant 0 : i32
    return %arg0, %arg1, %c0_i32 : i32, i32, i32
  }
  func.func @transform_1(%arg0: i32, %arg1: i32) -> (i32, i32, i32) {
    %c0_i32 = arith.constant 0 : i32
    %c0_i32_0 = arith.constant 0 : i32
    %c0_i32_1 = arith.constant 0 : i32
    return %arg0, %c0_i32, %c0_i32_0 : i32, i32, i32
  }
  func.func @transform_2(%arg0: i32, %arg1: i32) -> (i32, i32, i32) {
    %c0_i32 = arith.constant 0 : i32
    %c0_i32_0 = arith.constant 0 : i32
    %c0_i32_1 = arith.constant 0 : i32
    return %arg0, %c0_i32, %c0_i32_0 : i32, i32, i32
  }
  func.func @transform_3(%arg0: i32, %arg1: i32) -> (i32, i32, i32) {
    %c0_i32 = arith.constant 0 : i32
    %c0_i32_0 = arith.constant 0 : i32
    %c0_i32_1 = arith.constant 0 : i32
    return %arg0, %c0_i32, %c0_i32_0 : i32, i32, i32
  }
  func.func @transform_4(%arg0: i32, %arg1: i32) -> (i32, i32, i32) {
    %c0_i32 = arith.constant 0 : i32
    %c0_i32_0 = arith.constant 0 : i32
    return %arg0, %arg1, %c0_i32 : i32, i32, i32
  }
}

</mosaic_0001>

<llo_original>
// kernel: tpu_custom_call.1
$region0: #{tpu_custom_call.1}
  #allocation0 [shape = 'u32[]', space=smem, size = 0x4, offset = 0x4, fixed_abs, tag = 'smem constant byte address 0x4 - core index']
  #allocation1 [shape = 'u32[72,128]{1,0:T(1,128)}', space=vmem, size = 0x9000, scoped, tag = 'internal scratch']
  %s0 = inlined_call_operand.vmem [shape: f32[2,16,3], index: 0, kind: input, shape index: {}]
  %s1 = inlined_call_operand.vmem [shape: f32[2,8,3], index: 1, kind: input, shape index: {}]
  %s2 = inlined_call_operand.vmem [shape: f32[2,1,8], index: 2, kind: input, shape index: {}]
  %s3 = inlined_call_operand.vmem [shape: f32[2,8,6], index: 3, kind: input, shape index: {}]
  %s4 = inlined_call_operand.vmem [shape: f32[2,16,6], index: 4, kind: output, shape index: {}]
  %s5 = sld [smem:[#allocation0]]
  $region49: #{tpu_custom_call.1} parent=0
    _
  %s7 = ssub.s32 1, %s5
  %s8 = scalar_select 0, %s7, %s5
  loop: start=0, step=1, limit=4
  $region2: #{tpu_custom_call.1} parent=0 // loop_pre_header
    _
  $region3: #{tpu_custom_call.1} parent=0 // loop_header
    %s10 = sphi 0, %s14
    %p11 = scmp.ge.s32.totalorder %s10, 4
    %s17 = sphi 0, %s29
    %s18 = sphi 0, %s25
    %s19 = sphi 0, %s17
    %s20 = sphi 0, %s18
    %s21 = sphi 0, %s19
    %s22 = sphi 0, %s20
    %s34 = sphi 0, %s36
    %s37 = sphi 0, %s34
    %s38 = sphi 0, %s37
    %s54 = sphi 0, %s38
    %s60 = sphi 0, %s62
    %s63 = sphi 0, %s60
    %s64 = sphi 0, %s63
    %s80 = sphi 0, %s64
    %s86 = sphi 0, %s88
    %s89 = sphi 0, %s86
    %s90 = sphi 0, %s89
    %s106 = sphi 0, %s90
    %s112 = sphi 0, %s114
    %s115 = sphi 0, %s112
    %s116 = sphi 0, %s115
    %s132 = sphi 0, %s116
    %s140 = sphi 0, %s142
    %s143 = sphi 0, %s140
    %s144 = sphi 0, %s143
    %s160 = sphi 0, %s144
  $region4: #{tpu_custom_call.1} parent=0 // loop_header_branch
    %13 = sbr.rel (%p11) target = $region8
  $region5: #{tpu_custom_call.1} parent=0 // loop_body
    %s15 = ssub.s32 %s10, 1
    %s16 = ssub.s32 %s10, 2
    %s23 = sadd.s32 1, %s18
    %p24 = scmp.ge.s32.totalorder %s23, 1
    %s25 = scalar_select %p24, 0, %s23
    %s26 = sadd.s32 1, %s17
    %s27 = scalar_select %p24, %s26, %s17
    %p28 = scmp.ge.s32.totalorder %s27, 2
    %s29 = scalar_select %p28, 0, %s27
    %s30 = ssub.s32 %s17, %s29
    %s31 = ssub.s32 %s18, %s25
    %s32 = sor.u32 %s30, %s31
    %p33 = scmp.eq.s32.totalorder %s32, 0
    %s35 = sadd.s32 %s34, 1
    %s36 = scalar_select %p33, %s34, %s35
    %p39 = pneg %p33
    %p40 = scmp.eq.s32.totalorder %s10, 1
    %p41 = por %p39, %p40
    %p42 = scmp.ne.s32.totalorder %s34, %s37
    %p43 = scmp.eq.s32.totalorder %s10, 0
    %p44 = por %p42, %p43
    %p45 = scmp.ne.s32.totalorder %s34, %s37
    %p46 = scmp.eq.s32.totalorder %s15, 1
    %p47 = por %p45, %p46
    %p48 = scmp.ne.s32.totalorder %s37, %s38
    %p49 = scmp.eq.s32.totalorder %s15, 0
    %p50 = por %p48, %p49
    %p51 = scmp.ne.s32.totalorder %s37, %s38
    %p52 = scmp.eq.s32.totalorder %s16, 1
    %p53 = por %p51, %p52
    %p55 = scmp.ne.s32.totalorder %s38, %s54
    %p56 = scmp.eq.s32.totalorder %s16, 0
    %p57 = por %p55, %p56
    %s58 = ssub.s32 %s17, %s29
    %p59 = scmp.eq.s32.totalorder %s58, 0
    %s61 = sadd.s32 %s60, 1
    %s62 = scalar_select %p59, %s60, %s61
    %p65 = pneg %p59
    %p66 = scmp.eq.s32.totalorder %s10, 1
    %p67 = por %p65, %p66
    %p68 = scmp.ne.s32.totalorder %s60, %s63
    %p69 = scmp.eq.s32.totalorder %s10, 0
    %p70 = por %p68, %p69
    %p71 = scmp.ne.s32.totalorder %s60, %s63
    %p72 = scmp.eq.s32.totalorder %s15, 1
    %p73 = por %p71, %p72
    %p74 = scmp.ne.s32.totalorder %s63, %s64
    %p75 = scmp.eq.s32.totalorder %s15, 0
    %p76 = por %p74, %p75
    %p77 = scmp.ne.s32.totalorder %s63, %s64
    %p78 = scmp.eq.s32.totalorder %s16, 1
    %p79 = por %p77, %p78
    %p81 = scmp.ne.s32.totalorder %s64, %s80
    %p82 = scmp.eq.s32.totalorder %s16, 0
    %p83 = por %p81, %p82
    %s84 = ssub.s32 %s17, %s29
    %p85 = scmp.eq.s32.totalorder %s84, 0
    %s87 = sadd.s32 %s86, 1
    %s88 = scalar_select %p85, %s86, %s87
    %p91 = pneg %p85
    %p92 = scmp.eq.s32.totalorder %s10, 1
    %p93 = por %p91, %p92
    %p94 = scmp.ne.s32.totalorder %s86, %s89
    %p95 = scmp.eq.s32.totalorder %s10, 0
    %p96 = por %p94, %p95
    %p97 = scmp.ne.s32.totalorder %s86, %s89
    %p98 = scmp.eq.s32.totalorder %s15, 1
    %p99 = por %p97, %p98
    %p100 = scmp.ne.s32.totalorder %s89, %s90
    %p101 = scmp.eq.s32.totalorder %s15, 0
    %p102 = por %p100, %p101
    %p103 = scmp.ne.s32.totalorder %s89, %s90
    %p104 = scmp.eq.s32.totalorder %s16, 1
    %p105 = por %p103, %p104
    %p107 = scmp.ne.s32.totalorder %s90, %s106
    %p108 = scmp.eq.s32.totalorder %s16, 0
    %p109 = por %p107, %p108
    %s110 = ssub.s32 %s17, %s29
    %p111 = scmp.eq.s32.totalorder %s110, 0
    %s113 = sadd.s32 %s112, 1
    %s114 = scalar_select %p111, %s112, %s113
    %p117 = pneg %p111
    %p118 = scmp.eq.s32.totalorder %s10, 1
    %p119 = por %p117, %p118
    %p120 = scmp.ne.s32.totalorder %s112, %s115
    %p121 = scmp.eq.s32.totalorder %s10, 0
    %p122 = por %p120, %p121
    %p123 = scmp.ne.s32.totalorder %s112, %s115
    %p124 = scmp.eq.s32.totalorder %s15, 1
    %p125 = por %p123, %p124
    %p126 = scmp.ne.s32.totalorder %s115, %s116
    %p127 = scmp.eq.s32.totalorder %s15, 0
    %p128 = por %p126, %p127
    %p129 = scmp.ne.s32.totalorder %s115, %s116
    %p130 = scmp.eq.s32.totalorder %s16, 1
    %p131 = por %p129, %p130
    %p133 = scmp.ne.s32.totalorder %s116, %s132
    %p134 = scmp.eq.s32.totalorder %s16, 0
    %p135 = por %p133, %p134
    %s136 = ssub.s32 %s17, %s29
    %s137 = ssub.s32 %s18, %s25
    %s138 = sor.u32 %s136, %s137
    %p139 = scmp.eq.s32.totalorder %s138, 0
    %s141 = sadd.s32 %s140, 1
    %s142 = scalar_select %p139, %s140, %s141
    %p145 = pneg %p139
    %p146 = scmp.eq.s32.totalorder %s10, 1
    %p147 = por %p145, %p146
    %p148 = scmp.ne.s32.totalorder %s140, %s143
    %p149 = scmp.eq.s32.totalorder %s10, 0
    %p150 = por %p148, %p149
    %p151 = scmp.ne.s32.totalorder %s140, %s143
    %p152 = scmp.eq.s32.totalorder %s15, 1
    %p153 = por %p151, %p152
    %p154 = scmp.ne.s32.totalorder %s143, %s144
    %p155 = scmp.eq.s32.totalorder %s15, 0
    %p156 = por %p154, %p155
    %p157 = scmp.ne.s32.totalorder %s143, %s144
    %p158 = scmp.eq.s32.totalorder %s16, 1
    %p159 = por %p157, %p158
    %p161 = scmp.ne.s32.totalorder %s144, %s160
    %p162 = scmp.eq.s32.totalorder %s16, 0
    %p163 = por %p161, %p162
    %p164 = scmp.le.s32.totalorder 1, %s10
    %p165 = scmp.lt.s32.totalorder %s10, 3
    %p166 = pnand %p164, %p165
    %p167 = pneg %p166
    // Predicated region
    $region9: #{tpu_custom_call.1} parent=5 // pred_check
      _
    $region10: #{tpu_custom_call.1} parent=5 // pred_check_branch
      %169 = sbr.rel (%p166) target = $region12
    $region11: #{tpu_custom_call.1} parent=5 // pred_region
      %s170 = ssub.s32 %s10, 1
    $region12: #{tpu_custom_call.1} parent=5 // pred_fallthru
      _
    %p171 = scmp.lt.s32.totalorder %s10, 2
    // Predicated region
    $region13: #{tpu_custom_call.1} parent=5 // pred_check
      %p172 = pneg %p171
    $region14: #{tpu_custom_call.1} parent=5 // pred_check_branch
      %174 = sbr.rel (%p172) target = $region16
    $region15: #{tpu_custom_call.1} parent=5 // pred_region
      // Predicated region
      $region17: #{tpu_custom_call.1} parent=15 // pred_check
        %p175 = pneg %p44
      $region18: #{tpu_custom_call.1} parent=15 // pred_check_branch
        %177 = sbr.rel (%p175) target = $region20
      $region19: #{tpu_custom_call.1} parent=15 // pred_region
        %s178 = smul.u32 2, %s18
        %p179 = scmp.lt.s32.totalorder %s17, 1
        %s180 = scalar_select %p179, %s17, 1
        %p181 = scmp.lt.s32.totalorder %s178, 1
        %s182 = scalar_select %p181, %s178, 1
        %s183 = smul.addr %s180, 2
        %s184 = sadd.s32 %s182, %s183
        %s185 = smul.addr %s184, 8
        %s186 = scalar_lea.vmem %s0, %s185
        %s187 = smul.u32 2, %s18
      $region20: #{tpu_custom_call.1} parent=15 // pred_fallthru
        _
      // Predicated region
      $region21: #{tpu_custom_call.1} parent=15 // pred_check
        %p188 = pneg %p70
      $region22: #{tpu_custom_call.1} parent=15 // pred_check_branch
        %190 = sbr.rel (%p188) target = $region24
      $region23: #{tpu_custom_call.1} parent=15 // pred_region
        %p191 = scmp.lt.s32.totalorder %s17, 1
        %s192 = scalar_select %p191, %s17, 1
        %s193 = smul.addr %s192, 8
        %s194 = scalar_lea.vmem %s1, %s193
      $region24: #{tpu_custom_call.1} parent=15 // pred_fallthru
        _
      // Predicated region
      $region25: #{tpu_custom_call.1} parent=15 // pred_check
        %p195 = pneg %p96
      $region26: #{tpu_custom_call.1} parent=15 // pred_check_branch
        %197 = sbr.rel (%p195) target = $region28
      $region27: #{tpu_custom_call.1} parent=15 // pred_region
        %p198 = scmp.lt.s32.totalorder %s17, 1
        %s199 = scalar_select %p198, %s17, 1
        %s200 = scalar_lea.vmem %s2, %s199
      $region28: #{tpu_custom_call.1} parent=15 // pred_fallthru
        _
      // Predicated region
      $region29: #{tpu_custom_call.1} parent=15 // pred_check
        %p201 = pneg %p122
      $region30: #{tpu_custom_call.1} parent=15 // pred_check_branch
        %203 = sbr.rel (%p201) target = $region32
      $region31: #{tpu_custom_call.1} parent=15 // pred_region
        %p204 = scmp.lt.s32.totalorder %s17, 1
        %s205 = scalar_select %p204, %s17, 1
        %s206 = smul.addr %s205, 8
        %s207 = scalar_lea.vmem %s3, %s206
      $region32: #{tpu_custom_call.1} parent=15 // pred_fallthru
        _
    $region16: #{tpu_custom_call.1} parent=5 // pred_fallthru
      _
    %p208 = scmp.le.s32.totalorder 1, %s10
    %p209 = scmp.lt.s32.totalorder %s10, 3
    %p210 = pnand %p208, %p209
    %p211 = pneg %p210
    // Predicated region
    $region33: #{tpu_custom_call.1} parent=5 // pred_check
      _
    $region34: #{tpu_custom_call.1} parent=5 // pred_check_branch
      %213 = sbr.rel (%p210) target = $region36
    $region35: #{tpu_custom_call.1} parent=5 // pred_region
      %s214 = ssub.s32 %s10, 1
      %s215 = smul.u32 2, %s20
      %p216 = scmp.lt.s32.totalorder %s19, 1
      %s217 = scalar_select %p216, %s19, 1
      %p218 = scmp.lt.s32.totalorder %s215, 1
      %s219 = scalar_select %p218, %s215, 1
      %s220 = smul.addr %s217, 2
      %s221 = sadd.s32 %s219, %s220
      %s222 = smul.addr %s221, 8
      %s223 = scalar_lea.vmem %s0, %s222
      %p224 = pneg %p50
      %p225 = pneg %p47
      %p226 = scmp.lt.s32.totalorder %s19, 1
      %s227 = scalar_select %p226, %s19, 1
      %s228 = smul.addr %s227, 8
      %s229 = scalar_lea.vmem %s1, %s228
      %p230 = pneg %p76
      %p231 = pneg %p73
      %p232 = scmp.lt.s32.totalorder %s19, 1
      %s233 = scalar_select %p232, %s19, 1
      %s234 = scalar_lea.vmem %s2, %s233
      %p235 = pneg %p102
      %p236 = pneg %p99
      %p237 = scmp.lt.s32.totalorder %s19, 1
      %s238 = scalar_select %p237, %s19, 1
      %s239 = smul.addr %s238, 8
      %s240 = scalar_lea.vmem %s3, %s239
      %p241 = pneg %p128
      %p242 = pneg %p125
      %p243 = pneg %p156
      %p244 = pneg %p153
      %s245 = smul.u32 2, %s20
      %p246 = scmp.lt.s32.totalorder %s19, 1
      %s247 = scalar_select %p246, %s19, 1
      %p248 = scmp.lt.s32.totalorder %s245, 1
      %s249 = scalar_select %p248, %s245, 1
      %s250 = smul.addr %s247, 2
      %s251 = sadd.s32 %s249, %s250
      %s252 = smul.addr %s251, 8
      %s253 = scalar_lea.vmem %s4, %s252
      %s254 = smul.u32 2, %s20
      %p255 = scmp.lt.s32.totalorder %s19, 1
      %s256 = scalar_select %p255, %s19, 1
      %p257 = scmp.lt.s32.totalorder %s254, 1
      %s258 = scalar_select %p257, %s254, 1
      %s259 = smul.addr %s256, 2
      %s260 = sadd.s32 %s258, %s259
      %s261 = smul.addr %s260, 8
      %s262 = scalar_lea.vmem %s0, %s261
      %s263 = smul.u32 2, %s20
      %p264 = scmp.lt.s32.totalorder %s19, 1
      %s265 = scalar_select %p264, %s19, 1
      %s266 = smul.addr %s265, 8
      %s267 = scalar_lea.vmem %s1, %s266
      %p268 = scmp.lt.s32.totalorder %s19, 1
      %s269 = scalar_select %p268, %s19, 1
      %s270 = scalar_lea.vmem %s2, %s269
      %p271 = scmp.lt.s32.totalorder %s19, 1
      %s272 = scalar_select %p271, %s19, 1
      %s273 = smul.addr %s272, 8
      %s274 = scalar_lea.vmem %s3, %s273
      %s275 = smul.u32 2, %s20
      %p276 = scmp.lt.s32.totalorder %s19, 1
      %s277 = scalar_select %p276, %s19, 1
      %p278 = scmp.lt.s32.totalorder %s275, 1
      %s279 = scalar_select %p278, %s275, 1
      %s280 = smul.addr %s277, 2
      %s281 = sadd.s32 %s279, %s280
      %s282 = smul.addr %s281, 8
      %s283 = scalar_lea.vmem %s4, %s282
      %s284 = smul.u32 2, %s20
      %v285 = vld [vmem:[%s262] sm:$0xff]
      %v286 = vld [vmem:[%s262 + $0x8] sm:$0xff]
      %v287 = vld [vmem:[%s267] sm:$0xff]
      %v288 = vld [vmem:[%s270] sm:$0x1]
      %v289 = vld [vmem:[%s274] sm:$0xff]
      %vm290 = vcmask 23552
      %v292 = vsel %vm290, %v285, 0
      %v295 = vsel %vm290, %v286, 0
      %v298 = vsel %vm290, %v287, 0
      %300 = vmatpush.xpose.msra.mxu0 0.0
      %301 = vmatpush.xpose.msra.mxu0 0.0
      %302 = vmatpush.xpose.msra.mxu0 0.0
      %303 = vmatpush.xpose.msra.mxu0 0.0
      %304 = vmatpush.xpose.msra.mxu0 0.0
      %305 = vmatpush.xpose.msra.mxu0 0.0
      %306 = vmatpush.xpose.msra.mxu0 0.0
      %307 = vmatpush.xpose.msra.mxu0 0.0
      %308 = vmatpush.xpose.msra.mxu0 0.0
      %309 = vmatpush.xpose.msra.mxu0 0.0
      %310 = vmatpush.xpose.msra.mxu0 0.0
      %311 = vmatpush.xpose.msra.mxu0 0.0
      %312 = vmatpush.xpose.msra.mxu0 0.0
      %313 = vmatpush.xpose.msra.mxu0 0.0
      %314 = vmatpush.xpose.msra.mxu0 0.0
      %315 = vmatpush.xpose.msra.mxu0 %v298
      %316 = vmatmul.f32.gmra.mxu0 %v292
      %v317 = vpop.f32.mrf.mxu0
      %v318 = vadd.f32 0.0, %v317
      %319 = vmatmul.f32.gmra.mxu0 %v295
      %v320 = vpop.f32.mrf.mxu0
      %v321 = vadd.f32 0.0, %v320
      %322 = vdwg.mxu0
      %v323 = vmul.f32 %v318, -2.0
      %v324 = vmul.f32 %v321, -2.0
      %v325 = vmul.f32 %v285, %v285
      %v326 = vmul.f32 %v286, %v286
      %v327 = vsel %vm290, %v325, 0.0
      %328 = vadd.xlane.f32.xlu0 %v327
      %v329 = vpop.xlane.xlu0 %328
      %v330 = vsel %vm290, %v326, 0.0
      %331 = vadd.xlane.f32.xlu0 %v330
      %v332 = vpop.xlane.xlu0 %331
      %v333 = vadd.f32 %v323, %v329
      %v334 = vadd.f32 %v324, %v332
      %v336 = vperm.slane %v288, 0
      %v338 = vadd.f32 %v333, %v336
      %v339 = vadd.f32 %v334, %v336
      %v340 = vmax.f32 %v338, 0.0
      %v341 = vmax.f32 %v339, 0.0
      %v342 = vlaneseq
      %v343 = vand.u32 %v342, 127
      %vm344 = vcmask 64512
      %v345 = vsel %vm344, %v340, inf
      %346 = vmin.xlane.f32.xlu0 %v345
      %v347 = vpop.xlane.xlu0 %346
      %v348 = vsel %vm344, %v341, inf
      %349 = vmin.xlane.f32.xlu0 %v348
      %v350 = vpop.xlane.xlu0 %349
      %vm351 = vcmp.eq.f32.partialorder %v340, %v347
      %vm352 = vcmp.eq.f32.partialorder %v341, %v350
      %v353 = vsel %vm351, %v343, 8
      %v354 = vsel %vm352, %v343, 8
      %v355 = vsel %vm344, %v353, 2147483647
      %v356 = vand.u32 %v355, 65535
      %v357 = vshra.s32 %v355, 16
      %v358 = vcvt.s32.f32 %v356
      %v359 = vcvt.s32.f32 %v357
      %360 = vmin.xlane.f32.xlu0 %v359
      %v361 = vpop.xlane.xlu0 %360
      %vm362 = vcmp.eq.f32.partialorder %v359, %v361
      %v363 = vsel %vm362, %v358, inf
      %364 = vmin.xlane.f32.xlu0 %v363
      %v365 = vpop.xlane.xlu0 %364
      %v366 = vcvt.f32.s32 %v365
      %v367 = vcvt.f32.s32 %v361
      %v368 = vshll.u32 %v367, 16
      %v369 = vadd.s32 %v368, %v366
      %v370 = vsel %vm344, %v354, 2147483647
      %v371 = vand.u32 %v370, 65535
      %v372 = vshra.s32 %v370, 16
      %v373 = vcvt.s32.f32 %v371
      %v374 = vcvt.s32.f32 %v372
      %375 = vmin.xlane.f32.xlu0 %v374
      %v376 = vpop.xlane.xlu0 %375
      %vm377 = vcmp.eq.f32.partialorder %v374, %v376
      %v378 = vsel %vm377, %v373, inf
      %379 = vmin.xlane.f32.xlu0 %v378
      %v380 = vpop.xlane.xlu0 %379
      %v381 = vcvt.f32.s32 %v380
      %v382 = vcvt.f32.s32 %v376
      %v383 = vshll.u32 %v382, 16
      %v384 = vadd.s32 %v383, %v381
      %vm385 = vcmp.eq.s32.totalorder %v343, %v369
      %vm386 = vcmp.eq.s32.totalorder %v343, %v384
      %v387 = vadd.f32 %v347, 1e-08
      %v388 = vadd.f32 %v350, 1e-08
      %v389 = vrcp.pop %v387
      %v390 = vmul.f32 %v387, %v389
      %v391 = vsub.f32 1.0, %v390
      %v392 = vmul.f32 %v389, %v391
      %v393 = vadd.f32 %v389, %v392
      %vm394 = vweird.f32 %v387
      %vm395 = vweird.f32 %v389
      %vm396 = vmor %vm394, %vm395
      %v397 = vsel %vm396, %v389, %v393
      %v398 = vand.u32 2147483647, %v387
      %vm399 = vcmp.eq.f32.partialorder %v398, 8.507059e+37
      %v400 = vand.u32 %v387, 2147483648
      %v401 = vor.u32 1.1754944e-38, %v400
      %v402 = vsel %vm399, %v401, %v397
      %v403 = vmul.f32 1.0, %v402
      %v404 = vrcp.pop %v388
      %v405 = vmul.f32 %v388, %v404
      %v406 = vsub.f32 1.0, %v405
      %v407 = vmul.f32 %v404, %v406
      %v408 = vadd.f32 %v404, %v407
      %vm409 = vweird.f32 %v388
      %vm410 = vweird.f32 %v404
      %vm411 = vmor %vm409, %vm410
      %v412 = vsel %vm411, %v404, %v408
      %v413 = vand.u32 2147483647, %v388
      %vm414 = vcmp.eq.f32.partialorder %v413, 8.507059e+37
      %v415 = vand.u32 %v388, 2147483648
      %v416 = vor.u32 1.1754944e-38, %v415
      %v417 = vsel %vm414, %v416, %v412
      %v418 = vmul.f32 1.0, %v417
      %v419 = vsel %vm385, %v403, 0.0
      %v420 = vsel %vm386, %v418, 0.0
      %v421 = vadd.f32 %v419, 0.0
      %v422 = vadd.f32 %v420, 0.0
      %v423 = vadd.f32 %v403, 0.0
      %v424 = vadd.f32 %v418, 0.0
      %v425 = vsel %vm385, 1e+30, %v340
      %v426 = vsel %vm386, 1e+30, %v341
      %v427 = vsel %vm344, %v425, inf
      %428 = vmin.xlane.f32.xlu0 %v427
      %v429 = vpop.xlane.xlu0 %428
      %v430 = vsel %vm344, %v426, inf
      %431 = vmin.xlane.f32.xlu0 %v430
      %v432 = vpop.xlane.xlu0 %431
      %vm433 = vcmp.eq.f32.partialorder %v425, %v429
      %vm434 = vcmp.eq.f32.partialorder %v426, %v432
      %v435 = vsel %vm433, %v343, 8
      %v436 = vsel %vm434, %v343, 8
      %v437 = vsel %vm344, %v435, 2147483647
      %v438 = vand.u32 %v437, 65535
      %v439 = vshra.s32 %v437, 16
      %v440 = vcvt.s32.f32 %v438
      %v441 = vcvt.s32.f32 %v439
      %442 = vmin.xlane.f32.xlu0 %v441
      %v443 = vpop.xlane.xlu0 %442
      %vm444 = vcmp.eq.f32.partialorder %v441, %v443
      %v445 = vsel %vm444, %v440, inf
      %446 = vmin.xlane.f32.xlu0 %v445
      %v447 = vpop.xlane.xlu0 %446
      %v448 = vcvt.f32.s32 %v447
      %v449 = vcvt.f32.s32 %v443
      %v450 = vshll.u32 %v449, 16
      %v451 = vadd.s32 %v450, %v448
      %v452 = vsel %vm344, %v436, 2147483647
      %v453 = vand.u32 %v452, 65535
      %v454 = vshra.s32 %v452, 16
      %v455 = vcvt.s32.f32 %v453
      %v456 = vcvt.s32.f32 %v454
      %457 = vmin.xlane.f32.xlu0 %v456
      %v458 = vpop.xlane.xlu0 %457
      %vm459 = vcmp.eq.f32.partialorder %v456, %v458
      %v460 = vsel %vm459, %v455, inf
      %461 = vmin.xlane.f32.xlu0 %v460
      %v462 = vpop.xlane.xlu0 %461
      %v463 = vcvt.f32.s32 %v462
      %v464 = vcvt.f32.s32 %v458
      %v465 = vshll.u32 %v464, 16
      %v466 = vadd.s32 %v465, %v463
      %vm467 = vcmp.eq.s32.totalorder %v343, %v451
      %vm468 = vcmp.eq.s32.totalorder %v343, %v466
      %v469 = vadd.f32 %v429, 1e-08
      %v470 = vadd.f32 %v432, 1e-08
      %v471 = vrcp.pop %v469
      %v472 = vmul.f32 %v469, %v471
      %v473 = vsub.f32 1.0, %v472
      %v474 = vmul.f32 %v471, %v473
      %v475 = vadd.f32 %v471, %v474
      %vm476 = vweird.f32 %v469
      %vm477 = vweird.f32 %v471
      %vm478 = vmor %vm476, %vm477
      %v479 = vsel %vm478, %v471, %v475
      %v480 = vand.u32 2147483647, %v469
      %vm481 = vcmp.eq.f32.partialorder %v480, 8.507059e+37
      %v482 = vand.u32 %v469, 2147483648
      %v483 = vor.u32 1.1754944e-38, %v482
      %v484 = vsel %vm481, %v483, %v479
      %v485 = vmul.f32 1.0, %v484
      %v486 = vrcp.pop %v470
      %v487 = vmul.f32 %v470, %v486
      %v488 = vsub.f32 1.0, %v487
      %v489 = vmul.f32 %v486, %v488
      %v490 = vadd.f32 %v486, %v489
      %vm491 = vweird.f32 %v470
      %vm492 = vweird.f32 %v486
      %vm493 = vmor %vm491, %vm492
      %v494 = vsel %vm493, %v486, %v490
      %v495 = vand.u32 2147483647, %v470
      %vm496 = vcmp.eq.f32.partialorder %v495, 8.507059e+37
      %v497 = vand.u32 %v470, 2147483648
      %v498 = vor.u32 1.1754944e-38, %v497
      %v499 = vsel %vm496, %v498, %v494
      %v500 = vmul.f32 1.0, %v499
      %v501 = vsel %vm467, %v485, 0.0
      %v502 = vsel %vm468, %v500, 0.0
      %v503 = vadd.f32 %v421, %v501
      %v504 = vadd.f32 %v422, %v502
      %v505 = vadd.f32 %v423, %v485
      %v506 = vadd.f32 %v424, %v500
      %v507 = vsel %vm467, 1e+30, %v425
      %v508 = vsel %vm468, 1e+30, %v426
      %v509 = vsel %vm344, %v507, inf
      %510 = vmin.xlane.f32.xlu0 %v509
      %v511 = vpop.xlane.xlu0 %510
      %v512 = vsel %vm344, %v508, inf
      %513 = vmin.xlane.f32.xlu0 %v512
      %v514 = vpop.xlane.xlu0 %513
      %vm515 = vcmp.eq.f32.partialorder %v507, %v511
      %vm516 = vcmp.eq.f32.partialorder %v508, %v514
      %v517 = vsel %vm515, %v343, 8
      %v518 = vsel %vm516, %v343, 8
      %v519 = vsel %vm344, %v517, 2147483647
      %v520 = vand.u32 %v519, 65535
      %v521 = vshra.s32 %v519, 16
      %v522 = vcvt.s32.f32 %v520
      %v523 = vcvt.s32.f32 %v521
      %524 = vmin.xlane.f32.xlu0 %v523
      %v525 = vpop.xlane.xlu0 %524
      %vm526 = vcmp.eq.f32.partialorder %v523, %v525
      %v527 = vsel %vm526, %v522, inf
      %528 = vmin.xlane.f32.xlu0 %v527
      %v529 = vpop.xlane.xlu0 %528
      %v530 = vcvt.f32.s32 %v529
      %v531 = vcvt.f32.s32 %v525
      %v532 = vshll.u32 %v531, 16
      %v533 = vadd.s32 %v532, %v530
      %v534 = vsel %vm344, %v518, 2147483647
      %v535 = vand.u32 %v534, 65535
      %v536 = vshra.s32 %v534, 16
      %v537 = vcvt.s32.f32 %v535
      %v538 = vcvt.s32.f32 %v536
      %539 = vmin.xlane.f32.xlu0 %v538
      %v540 = vpop.xlane.xlu0 %539
      %vm541 = vcmp.eq.f32.partialorder %v538, %v540
      %v542 = vsel %vm541, %v537, inf
      %543 = vmin.xlane.f32.xlu0 %v542
      %v544 = vpop.xlane.xlu0 %543
      %v545 = vcvt.f32.s32 %v544
      %v546 = vcvt.f32.s32 %v540
      %v547 = vshll.u32 %v546, 16
      %v548 = vadd.s32 %v547, %v545
      %vm549 = vcmp.eq.s32.totalorder %v343, %v533
      %vm550 = vcmp.eq.s32.totalorder %v343, %v548
      %v551 = vadd.f32 %v511, 1e-08
      %v552 = vadd.f32 %v514, 1e-08
      %v553 = vrcp.pop %v551
      %v554 = vmul.f32 %v551, %v553
      %v555 = vsub.f32 1.0, %v554
      %v556 = vmul.f32 %v553, %v555
      %v557 = vadd.f32 %v553, %v556
      %vm558 = vweird.f32 %v551
      %vm559 = vweird.f32 %v553
      %vm560 = vmor %vm558, %vm559
      %v561 = vsel %vm560, %v553, %v557
      %v562 = vand.u32 2147483647, %v551
      %vm563 = vcmp.eq.f32.partialorder %v562, 8.507059e+37
      %v564 = vand.u32 %v551, 2147483648
      %v565 = vor.u32 1.1754944e-38, %v564
      %v566 = vsel %vm563, %v565, %v561
      %v567 = vmul.f32 1.0, %v566
      %v568 = vrcp.pop %v552
      %v569 = vmul.f32 %v552, %v568
      %v570 = vsub.f32 1.0, %v569
      %v571 = vmul.f32 %v568, %v570
      %v572 = vadd.f32 %v568, %v571
      %vm573 = vweird.f32 %v552
      %vm574 = vweird.f32 %v568
      %vm575 = vmor %vm573, %vm574
      %v576 = vsel %vm575, %v568, %v572
      %v577 = vand.u32 2147483647, %v552
      %vm578 = vcmp.eq.f32.partialorder %v577, 8.507059e+37
      %v579 = vand.u32 %v552, 2147483648
      %v580 = vor.u32 1.1754944e-38, %v579
      %v581 = vsel %vm578, %v580, %v576
      %v582 = vmul.f32 1.0, %v581
      %v583 = vsel %vm549, %v567, 0.0
      %v584 = vsel %vm550, %v582, 0.0
      %v585 = vadd.f32 %v503, %v583
      %v586 = vadd.f32 %v504, %v584
      %v587 = vadd.f32 %v505, %v567
      %v588 = vadd.f32 %v506, %v582
      %v589 = vrcp.pop %v587
      %v590 = vmul.f32 %v587, %v589
      %v591 = vsub.f32 1.0, %v590
      %v592 = vmul.f32 %v589, %v591
      %v593 = vadd.f32 %v589, %v592
      %vm594 = vweird.f32 %v587
      %vm595 = vweird.f32 %v589
      %vm596 = vmor %vm594, %vm595
      %v597 = vsel %vm596, %v589, %v593
      %v598 = vand.u32 2147483647, %v587
      %vm599 = vcmp.eq.f32.partialorder %v598, 8.507059e+37
      %v600 = vand.u32 %v587, 2147483648
      %v601 = vor.u32 1.1754944e-38, %v600
      %v602 = vsel %vm599, %v601, %v597
      %v603 = vmul.f32 %v585, %v602
      %v604 = vrcp.pop %v588
      %v605 = vmul.f32 %v588, %v604
      %v606 = vsub.f32 1.0, %v605
      %v607 = vmul.f32 %v604, %v606
      %v608 = vadd.f32 %v604, %v607
      %vm609 = vweird.f32 %v588
      %vm610 = vweird.f32 %v604
      %vm611 = vmor %vm609, %vm610
      %v612 = vsel %vm611, %v604, %v608
      %v613 = vand.u32 2147483647, %v588
      %vm614 = vcmp.eq.f32.partialorder %v613, 8.507059e+37
      %v615 = vand.u32 %v588, 2147483648
      %v616 = vor.u32 1.1754944e-38, %v615
      %v617 = vsel %vm614, %v616, %v612
      %v618 = vmul.f32 %v586, %v617
      %v620 = vsel %vm344, %v603, 0
      %v623 = vsel %vm344, %v618, 0
      %625 = vmatpush.msra.mxu0 0.0
      %626 = vmatpush.msra.mxu0 0.0
      %627 = vmatpush.msra.mxu0 0.0
      %628 = vmatpush.msra.mxu0 0.0
      %629 = vmatpush.msra.mxu0 0.0
      %630 = vmatpush.msra.mxu0 0.0
      %631 = vmatpush.msra.mxu0 0.0
      %632 = vmatpush.msra.mxu0 0.0
      %633 = vmatpush.msra.mxu0 0.0
      %634 = vmatpush.msra.mxu0 0.0
      %635 = vmatpush.msra.mxu0 0.0
      %636 = vmatpush.msra.mxu0 0.0
      %637 = vmatpush.msra.mxu0 0.0
      %638 = vmatpush.msra.mxu0 0.0
      %639 = vmatpush.msra.mxu0 0.0
      %640 = vmatpush.msra.mxu0 %v289
      %641 = vmatmul.f32.gmra.mxu0 %v620
      %v642 = vpop.f32.mrf.mxu0
      %v643 = vadd.f32 0.0, %v642
      %644 = vmatmul.f32.gmra.mxu0 %v623
      %v645 = vpop.f32.mrf.mxu0
      %v646 = vadd.f32 0.0, %v645
      %647 = vdwg.mxu0
      %vm648 = vcmask 48128
      %649 = vst.msk [vmem:[%s283] sm:$0xff] %vm648, %v643
      %650 = vst.msk [vmem:[%s283 + $0x8] sm:$0xff] %vm648, %v646
      %s651 = smul.u32 2, %s20
      %p652 = scmp.lt.s32.totalorder %s19, 1
      %s653 = scalar_select %p652, %s19, 1
      %p654 = scmp.lt.s32.totalorder %s651, 1
      %s655 = scalar_select %p654, %s651, 1
      %s656 = smul.addr %s653, 2
      %s657 = sadd.s32 %s655, %s656
      %s658 = smul.addr %s657, 8
      %s659 = scalar_lea.vmem %s4, %s658
      // Predicated region
      $region37: #{tpu_custom_call.1} parent=35 // pred_check
        %p660 = pneg %p153
      $region38: #{tpu_custom_call.1} parent=35 // pred_check_branch
        %662 = sbr.rel (%p660) target = $region40
      $region39: #{tpu_custom_call.1} parent=35 // pred_region
        %s663 = smul.u32 2, %s20
      $region40: #{tpu_custom_call.1} parent=35 // pred_fallthru
        _
    $region36: #{tpu_custom_call.1} parent=5 // pred_fallthru
      _
    %p664 = scmp.le.s32.totalorder 2, %s10
    // Predicated region
    $region41: #{tpu_custom_call.1} parent=5 // pred_check
      %p665 = pneg %p664
    $region42: #{tpu_custom_call.1} parent=5 // pred_check_branch
      %667 = sbr.rel (%p665) target = $region44
    $region43: #{tpu_custom_call.1} parent=5 // pred_region
      %s668 = ssub.s32 %s10, 2
      // Predicated region
      $region45: #{tpu_custom_call.1} parent=43 // pred_check
        %p669 = pneg %p159
      $region46: #{tpu_custom_call.1} parent=43 // pred_check_branch
        %671 = sbr.rel (%p669) target = $region48
      $region47: #{tpu_custom_call.1} parent=43 // pred_region
        %s672 = smul.u32 2, %s22
        %p673 = scmp.lt.s32.totalorder %s21, 1
        %s674 = scalar_select %p673, %s21, 1
        %p675 = scmp.lt.s32.totalorder %s672, 1
        %s676 = scalar_select %p675, %s672, 1
        %s677 = smul.addr %s674, 2
        %s678 = sadd.s32 %s676, %s677
        %s679 = smul.addr %s678, 8
        %s680 = scalar_lea.vmem %s4, %s679
      $region48: #{tpu_custom_call.1} parent=43 // pred_fallthru
        _
    $region44: #{tpu_custom_call.1} parent=5 // pred_fallthru
      _
  $region6: #{tpu_custom_call.1} parent=0 // loop_footer
    %s14 = sadd.s32 1, %s10
  $region7: #{tpu_custom_call.1} parent=0 // loop_footer_branch
    %9 = sbr.rel target = $region3
  $region8: #{tpu_custom_call.1} parent=0 // loop_exit
    _

</llo_original>
